<compile_context>
chip_gen: v7x
topology: tpu7x:2x2x1
jax: 0.10.0
libtpu: 0.0.40
codegen_flags: <defaults>
</compile_context>

<pallas_src>
import functools
import math

import jax
import jax.numpy as jnp
from jax.experimental import pallas as pl
from jax.experimental.pallas import tpu as pltpu


def _arc_margin_kernel(x_ref, w_ref, label_ref, out_ref, *,
                       s, cos_m, sin_m, tile_n, use_bf16):
    x = x_ref[...].astype(jnp.float32)          # (TB, D)
    w = w_ref[...].astype(jnp.float32)          # (TN, D)

    # F.normalize(v, p=2, dim=1, eps=1e-12): v / max(||v||, eps)
    #   == v * rsqrt(max(||v||^2, eps^2))   (rsqrt -> EUP, no divide)
    eps2 = 1e-24
    x_n = x * jax.lax.rsqrt(jnp.maximum(jnp.sum(x * x, axis=1, keepdims=True), eps2))
    w_n = w * jax.lax.rsqrt(jnp.maximum(jnp.sum(w * w, axis=1, keepdims=True), eps2))

    # cosine = x_n @ w_n^T, contracting on D (no transpose of W), f32 accumulate.
    mm_dtype = jnp.bfloat16 if use_bf16 else jnp.float32
    cosine = jax.lax.dot_general(
        x_n.astype(mm_dtype), w_n.astype(mm_dtype),
        dimension_numbers=(((1,), (1,)), ((), ())),
        preferred_element_type=jnp.float32)     # (TB, TN)

    # Position of the label inside this class tile (scatter_ equivalent).
    label = label_ref[...]                                           # (TB, 1) int32
    col0 = pl.program_id(1) * tile_n
    col_ids = col0 + jax.lax.broadcasted_iota(jnp.int32, cosine.shape, 1)
    is_target = col_ids == label                                     # (TB, TN)

    # Margin applied only to the target column: extract the per-row target
    # cosine with a masked reduce (zero / no-op if the target column is not in
    # this tile), then do the cheap identity on a (TB, 1) vector.
    target_cos = jnp.sum(jnp.where(is_target, cosine, 0.0),
                         axis=1, keepdims=True)                      # (TB, 1)
    tc = jnp.clip(target_cos, -1.0 + 1e-7, 1.0 - 1e-7)
    # cos(acos(tc) + m) = tc*cos(m) - sqrt(1 - tc^2)*sin(m): one sqrt, no acos/cos.
    phi = tc * cos_m - jnp.sqrt(jnp.maximum(1.0 - tc * tc, 0.0)) * sin_m

    # logits = s * (one_hot * phi + (1 - one_hot) * cosine) as a single select.
    out_ref[...] = s * jnp.where(is_target, phi, cosine)


def _pick_tile(dim, want, quantum):
    """Largest tile <= want that divides dim and is a multiple of quantum; else dim."""
    if dim % want == 0:
        return want
    for t in range(min(want, dim), quantum - 1, -1):
        if dim % t == 0 and t % quantum == 0:
            return t
    return dim


def arc_margin_product(x, weight, label, s=30.0, m=0.5, *,
                       tile_b=128, tile_n=512, use_bf16_matmul=True):
    """x: (B, D) f32, weight: (N, D) f32, label: (B,) int -> (B, N) f32 logits."""
    B, D = x.shape
    N, _ = weight.shape
    label2d = label.reshape(B, 1).astype(jnp.int32)

    tb = _pick_tile(B, tile_b, 8)       # sublane-aligned batch tile
    tn = _pick_tile(N, tile_n, 128)     # lane-dense class tile
    grid = (B // tb, N // tn)

    kernel = functools.partial(
        _arc_margin_kernel,
        s=float(s), cos_m=float(math.cos(m)), sin_m=float(math.sin(m)),
        tile_n=tn, use_bf16=use_bf16_matmul)

    cost = pl.CostEstimate(
        flops=2 * B * N * D,
        transcendentals=B * (N // tn) + N * (B // tb) + B * (N // tn),
        bytes_accessed=4 * (B * D + (B // tb) * N * D + B + B * N))

    return pl.pallas_call(
        kernel,
        out_shape=jax.ShapeDtypeStruct((B, N), jnp.float32),
        grid=grid,
        in_specs=[
            pl.BlockSpec((tb, D), lambda bi, ni: (bi, 0)),   # x tile
            pl.BlockSpec((tn, D), lambda bi, ni: (ni, 0)),   # W tile (kept (N, D))
            pl.BlockSpec((tb, 1), lambda bi, ni: (bi, 0)),   # labels for this batch tile
        ],
        out_specs=pl.BlockSpec((tb, tn), lambda bi, ni: (bi, ni)),
        compiler_params=pltpu.CompilerParams(
            dimension_semantics=("parallel", "parallel")),
        cost_estimate=cost,
    )(x, weight, label2d)


def _reference(x, weight, label, s=30.0, m=0.5):
    """Pure-JAX port of the PyTorch module (acos/cos formulation)."""
    eps = 1e-12
    xn = x / jnp.maximum(jnp.linalg.norm(x, axis=1, keepdims=True), eps)
    wn = weight / jnp.maximum(jnp.linalg.norm(weight, axis=1, keepdims=True), eps)
    cosine = xn @ wn.T
    theta = jnp.arccos(jnp.clip(cosine, -1.0 + 1e-7, 1.0 - 1e-7))
    one_hot = jax.nn.one_hot(label, weight.shape[0], dtype=jnp.float32)
    return s * (one_hot * jnp.cos(theta + m) + (1.0 - one_hot) * cosine)


if __name__ == "__main__":
    # Small, module-consistent shapes: batch=8, in_features=32, out_features=128.
    B, D, N = 8, 32, 128
    key = jax.random.PRNGKey(0)
    kx, kw, kl = jax.random.split(key, 3)

    # Deterministic Xavier-uniform init for the (out_features, in_features) weight.
    bound = (6.0 / (D + N)) ** 0.5
    weight = jax.random.uniform(kw, (N, D), jnp.float32, -bound, bound)
    x = jax.random.normal(kx, (B, D), jnp.float32)
    label = jax.random.randint(kl, (B,), 0, N, jnp.int32)

    ref = _reference(x, weight, label, s=30.0, m=0.5)

    # Exact-math path (f32 MXU operands): tight match to the PyTorch formulation.
    logits_f32 = jax.block_until_ready(
        arc_margin_product(x, weight, label, s=30.0, m=0.5, use_bf16_matmul=False))
    assert logits_f32.shape == (B, N)
    assert jnp.allclose(logits_f32, ref, atol=1e-3, rtol=1e-3)

    # Production path (bf16 MXU operands, f32 accumulate): loose tolerance for
    # the bf16 operand rounding in the cosine matmul (scaled by s=30).
    logits_bf16 = jax.block_until_ready(
        arc_margin_product(x, weight, label, s=30.0, m=0.5, use_bf16_matmul=True))
    assert logits_bf16.shape == (B, N)
    assert jnp.allclose(logits_bf16, ref, atol=0.2, rtol=0.0)

    print("KERNEL_OK")
</pallas_src>

<mosaic_0001>
module attributes {stable_mosaic.version = 11 : i64} {
  func.func @_arc_margin_kernel(%arg0: i32, %arg1: i32, %arg2: memref<8x32xf32, #tpu.memory_space<vmem>>, %arg3: memref<128x32xf32, #tpu.memory_space<vmem>>, %arg4: memref<8x1xi32, #tpu.memory_space<vmem>>, %arg5: memref<8x128xf32, #tpu.memory_space<vmem>>) attributes {dimension_semantics = [#tpu.dimension_semantics<parallel>, #tpu.dimension_semantics<parallel>], iteration_bounds = array<i64: 1, 1>, scalar_prefetch = 0 : i64, scratch_operands = 0 : i64, tpu.core_type = #tpu.core_type<tc>, window_params = [{transform_indices = @transform_0, window_bounds = array<i64: 8, 32>}, {transform_indices = @transform_1, window_bounds = array<i64: 128, 32>}, {transform_indices = @transform_2, window_bounds = array<i64: 8, 1>}, {transform_indices = @transform_3, window_bounds = array<i64: 8, 128>}]} {
    %c0 = arith.constant 0 : index
    %c0_0 = arith.constant 0 : index
    %0 = vector.load %arg2[%c0, %c0_0] : memref<8x32xf32, #tpu.memory_space<vmem>>, vector<8x32xf32>
    %c0_1 = arith.constant 0 : index
    %c0_2 = arith.constant 0 : index
    %1 = vector.load %arg3[%c0_1, %c0_2] : memref<128x32xf32, #tpu.memory_space<vmem>>, vector<128x32xf32>
    %2 = arith.mulf %0, %0 : vector<8x32xf32>
    %cst = arith.constant dense<0.000000e+00> : vector<8xf32>
    %3 = vector.multi_reduction <add>, %2, %cst [1] : vector<8x32xf32> to vector<8xf32>
    %4 = vector.shape_cast %3 : vector<8xf32> to vector<8x1xf32>
    %cst_3 = arith.constant 1.000000e-24 : f32
    %5 = vector.broadcast %cst_3 : f32 to vector<8x1xf32>
    %6 = arith.maximumf %4, %5 : vector<8x1xf32>
    %7 = math.rsqrt %6 : vector<8x1xf32>
    %8 = vector.broadcast %7 : vector<8x1xf32> to vector<8x32xf32>
    %9 = arith.mulf %0, %8 : vector<8x32xf32>
    %10 = arith.mulf %1, %1 : vector<128x32xf32>
    %cst_4 = arith.constant dense<0.000000e+00> : vector<128xf32>
    %11 = vector.multi_reduction <add>, %10, %cst_4 [1] : vector<128x32xf32> to vector<128xf32>
    %12 = vector.shape_cast %11 : vector<128xf32> to vector<128x1xf32>
    %cst_5 = arith.constant 1.000000e-24 : f32
    %13 = vector.broadcast %cst_5 : f32 to vector<128x1xf32>
    %14 = arith.maximumf %12, %13 : vector<128x1xf32>
    %15 = math.rsqrt %14 : vector<128x1xf32>
    %16 = vector.broadcast %15 : vector<128x1xf32> to vector<128x32xf32>
    %17 = arith.mulf %1, %16 : vector<128x32xf32>
    %cst_6 = arith.constant dense<0.000000e+00> : vector<8x128xf32>
    %18 = tpu.matmul %9, %17, %cst_6 {dimension_numbers = #tpu.dot_dimension_numbers<[1], [1], [0], [0], [0, 0, 1, 0], [], []>} : vector<8x32xf32>, vector<128x32xf32>, vector<8x128xf32> -> vector<8x128xf32>
    %c0_7 = arith.constant 0 : index
    %c0_8 = arith.constant 0 : index
    %19 = vector.load %arg4[%c0_7, %c0_8] : memref<8x1xi32, #tpu.memory_space<vmem>>, vector<8x1xi32>
    %c128_i32 = arith.constant 128 : i32
    %20 = arith.muli %arg1, %c128_i32 : i32
    %21 = tpu.iota {dimensions = array<i32: 1>} : vector<8x128xi32>
    %22 = vector.broadcast %20 : i32 to vector<8x128xi32>
    %23 = arith.addi %22, %21 : vector<8x128xi32>
    %24 = vector.broadcast %19 : vector<8x1xi32> to vector<8x128xi32>
    %25 = arith.cmpi eq, %23, %24 : vector<8x128xi32>
    %cst_9 = arith.constant 0.000000e+00 : f32
    %26 = vector.broadcast %cst_9 : f32 to vector<8x128xf32>
    %27 = arith.select %25, %18, %26 : vector<8x128xi1>, vector<8x128xf32>
    %cst_10 = arith.constant dense<0.000000e+00> : vector<8xf32>
    %28 = vector.multi_reduction <add>, %27, %cst_10 [1] : vector<8x128xf32> to vector<8xf32>
    %29 = vector.shape_cast %28 : vector<8xf32> to vector<8x1xf32>
    %cst_11 = arith.constant -0.99999988 : f32
    %cst_12 = arith.constant 0.99999988 : f32
    %30 = vector.broadcast %cst_11 : f32 to vector<8x1xf32>
    %31 = arith.maximumf %30, %29 : vector<8x1xf32>
    %32 = vector.broadcast %cst_12 : f32 to vector<8x1xf32>
    %33 = arith.minimumf %32, %31 : vector<8x1xf32>
    %cst_13 = arith.constant 0.87758255 : f32
    %34 = vector.broadcast %cst_13 : f32 to vector<8x1xf32>
    %35 = arith.mulf %33, %34 : vector<8x1xf32>
    %36 = arith.mulf %33, %33 : vector<8x1xf32>
    %cst_14 = arith.constant 1.000000e+00 : f32
    %37 = vector.broadcast %cst_14 : f32 to vector<8x1xf32>
    %38 = arith.subf %37, %36 : vector<8x1xf32>
    %cst_15 = arith.constant 0.000000e+00 : f32
    %39 = vector.broadcast %cst_15 : f32 to vector<8x1xf32>
    %40 = arith.maximumf %38, %39 : vector<8x1xf32>
    %41 = math.sqrt %40 : vector<8x1xf32>
    %cst_16 = arith.constant 0.47942555 : f32
    %42 = vector.broadcast %cst_16 : f32 to vector<8x1xf32>
    %43 = arith.mulf %41, %42 : vector<8x1xf32>
    %44 = arith.subf %35, %43 : vector<8x1xf32>
    %45 = vector.shape_cast %44 : vector<8x1xf32> to vector<8x1xf32>
    %46 = vector.broadcast %45 : vector<8x1xf32> to vector<8x128xf32>
    %47 = arith.select %25, %46, %18 : vector<8x128xi1>, vector<8x128xf32>
    %cst_17 = arith.constant 3.000000e+01 : f32
    %48 = vector.broadcast %cst_17 : f32 to vector<8x128xf32>
    %49 = arith.mulf %48, %47 : vector<8x128xf32>
    %c0_18 = arith.constant 0 : index
    %c0_19 = arith.constant 0 : index
    %50 = vector.load %arg5[%c0_18, %c0_19] : memref<8x128xf32, #tpu.memory_space<vmem>>, vector<8x128xf32>
    tpu.vector_store %arg5[%c0_18, %c0_19], %49 {strides = array<i32>} : memref<8x128xf32, #tpu.memory_space<vmem>>, vector<8x128xf32>,
    return
  }
  func.func @transform_0(%arg0: i32, %arg1: i32) -> (i32, i32) {
    %c0_i32 = arith.constant 0 : i32
    %c0_i32_0 = arith.constant 0 : i32
    return %arg0, %c0_i32 : i32, i32
  }
  func.func @transform_1(%arg0: i32, %arg1: i32) -> (i32, i32) {
    %c0_i32 = arith.constant 0 : i32
    %c0_i32_0 = arith.constant 0 : i32
    return %arg1, %c0_i32 : i32, i32
  }
  func.func @transform_2(%arg0: i32, %arg1: i32) -> (i32, i32) {
    %c0_i32 = arith.constant 0 : i32
    %c0_i32_0 = arith.constant 0 : i32
    return %arg0, %c0_i32 : i32, i32
  }
  func.func @transform_3(%arg0: i32, %arg1: i32) -> (i32, i32) {
    %c0_i32 = arith.constant 0 : i32
    return %arg0, %arg1 : i32, i32
  }
}

</mosaic_0001>

<llo_original>
// kernel: tpu_custom_call.1
$region0: #{tpu_custom_call.1}
  #allocation0 [shape = 'u32[]', space=smem, size = 0x4, offset = 0x4, fixed_abs, tag = 'smem constant byte address 0x4 - core index']
  #allocation1 [shape = 'u32[144,128]{1,0:T(1,128)}', space=vmem, size = 0x12000, scoped, tag = 'internal scratch']
  %s0 = inlined_call_operand.vmem [shape: f32[8,32], index: 0, kind: input, shape index: {}]
  %s1 = inlined_call_operand.vmem [shape: f32[128,32], index: 1, kind: input, shape index: {}]
  %s2 = inlined_call_operand.vmem [shape: s32[8,1], index: 2, kind: input, shape index: {}]
  %s3 = inlined_call_operand.hbm [shape: f32[8,128], index: 3, kind: output, shape index: {}]
  %s4 = sld [smem:[#allocation0]]
  $region22: #{tpu_custom_call.1} parent=0
    _
  %s6 = ssub.s32 1, %s4
  %s7 = scalar_select 0, %s6, %s4
  $region1: #{tpu_custom_call.1} parent=0
    #allocation2 [shape = 'u8[4096]{0}', space=vmem, size = 0x1000, scoped, tag = 'output window, operand 0, single buffered']
    #allocation3 [shape = 's32[1]{0}', space=sflag, size = 0x4, scoped, tag = 'scoped memory for tpu_custom_call.1']
    %8 = vsyncpa [#allocation3], 0
    // Predicated region
    $region2: #{tpu_custom_call.1} parent=1 // pred_check
      _
    $region3: #{tpu_custom_call.1} parent=1 // pred_check_branch
      %10 = sbr.rel (0) target = $region5
    $region4: #{tpu_custom_call.1} parent=1 // pred_region
      _
    $region5: #{tpu_custom_call.1} parent=1 // pred_fallthru
      _
    // Predicated region
    $region6: #{tpu_custom_call.1} parent=1 // pred_check
      _
    $region7: #{tpu_custom_call.1} parent=1 // pred_check_branch
      %12 = sbr.rel (0) target = $region9
    $region8: #{tpu_custom_call.1} parent=1 // pred_region
      _
    $region9: #{tpu_custom_call.1} parent=1 // pred_fallthru
      _
    // Predicated region
    $region10: #{tpu_custom_call.1} parent=1 // pred_check
      _
    $region11: #{tpu_custom_call.1} parent=1 // pred_check_branch
      %14 = sbr.rel (0) target = $region13
    $region12: #{tpu_custom_call.1} parent=1 // pred_region
      _
    $region13: #{tpu_custom_call.1} parent=1 // pred_fallthru
      _
    %v15 = vld [vmem:[%s0] sm:$0xff]
    %v16 = vld [vmem:[%s1] sm:$0xff]
    %v17 = vld [vmem:[%s1 + $0x8] sm:$0xff]
    %v18 = vld [vmem:[%s1 + $0x10] sm:$0xff]
    %v19 = vld [vmem:[%s1 + $0x18] sm:$0xff]
    %v20 = vld [vmem:[%s1 + $0x20] sm:$0xff]
    %v21 = vld [vmem:[%s1 + $0x28] sm:$0xff]
    %v22 = vld [vmem:[%s1 + $0x30] sm:$0xff]
    %v23 = vld [vmem:[%s1 + $0x38] sm:$0xff]
    %v24 = vld [vmem:[%s1 + $0x40] sm:$0xff]
    %v25 = vld [vmem:[%s1 + $0x48] sm:$0xff]
    %v26 = vld [vmem:[%s1 + $0x50] sm:$0xff]
    %v27 = vld [vmem:[%s1 + $0x58] sm:$0xff]
    %v28 = vld [vmem:[%s1 + $0x60] sm:$0xff]
    %v29 = vld [vmem:[%s1 + $0x68] sm:$0xff]
    %v30 = vld [vmem:[%s1 + $0x70] sm:$0xff]
    %v31 = vld [vmem:[%s1 + $0x78] sm:$0xff]
    %v32 = vmul.f32 %v15, %v15
    %vm33 = vcmask 261120
    %v34 = vsel %vm33, %v32, 0.0
    %35 = vadd.xlane.f32.xlu0 %v34
    %v36 = vpop.xlane.xlu0 %35
    %v37 = vmax.f32 %v36, 1e-24
    %v38 = vrsqrt.pop %v37
    %v39 = vmul.f32 %v15, %v38
    %v40 = vmul.f32 %v16, %v16
    %v41 = vmul.f32 %v17, %v17
    %v42 = vmul.f32 %v18, %v18
    %v43 = vmul.f32 %v19, %v19
    %v44 = vmul.f32 %v20, %v20
    %v45 = vmul.f32 %v21, %v21
    %v46 = vmul.f32 %v22, %v22
    %v47 = vmul.f32 %v23, %v23
    %v48 = vmul.f32 %v24, %v24
    %v49 = vmul.f32 %v25, %v25
    %v50 = vmul.f32 %v26, %v26
    %v51 = vmul.f32 %v27, %v27
    %v52 = vmul.f32 %v28, %v28
    %v53 = vmul.f32 %v29, %v29
    %v54 = vmul.f32 %v30, %v30
    %v55 = vmul.f32 %v31, %v31
    %v56 = vsel %vm33, %v40, 0.0
    %57 = vadd.xlane.f32.xlu0 %v56
    %v58 = vpop.xlane.xlu0 %57
    %v59 = vsel %vm33, %v41, 0.0
    %60 = vadd.xlane.f32.xlu0 %v59
    %v61 = vpop.xlane.xlu0 %60
    %v62 = vsel %vm33, %v42, 0.0
    %63 = vadd.xlane.f32.xlu0 %v62
    %v64 = vpop.xlane.xlu0 %63
    %v65 = vsel %vm33, %v43, 0.0
    %66 = vadd.xlane.f32.xlu0 %v65
    %v67 = vpop.xlane.xlu0 %66
    %v68 = vsel %vm33, %v44, 0.0
    %69 = vadd.xlane.f32.xlu0 %v68
    %v70 = vpop.xlane.xlu0 %69
    %v71 = vsel %vm33, %v45, 0.0
    %72 = vadd.xlane.f32.xlu0 %v71
    %v73 = vpop.xlane.xlu0 %72
    %v74 = vsel %vm33, %v46, 0.0
    %75 = vadd.xlane.f32.xlu0 %v74
    %v76 = vpop.xlane.xlu0 %75
    %v77 = vsel %vm33, %v47, 0.0
    %78 = vadd.xlane.f32.xlu0 %v77
    %v79 = vpop.xlane.xlu0 %78
    %v80 = vsel %vm33, %v48, 0.0
    %81 = vadd.xlane.f32.xlu0 %v80
    %v82 = vpop.xlane.xlu0 %81
    %v83 = vsel %vm33, %v49, 0.0
    %84 = vadd.xlane.f32.xlu0 %v83
    %v85 = vpop.xlane.xlu0 %84
    %v86 = vsel %vm33, %v50, 0.0
    %87 = vadd.xlane.f32.xlu0 %v86
    %v88 = vpop.xlane.xlu0 %87
    %v89 = vsel %vm33, %v51, 0.0
    %90 = vadd.xlane.f32.xlu0 %v89
    %v91 = vpop.xlane.xlu0 %90
    %v92 = vsel %vm33, %v52, 0.0
    %93 = vadd.xlane.f32.xlu0 %v92
    %v94 = vpop.xlane.xlu0 %93
    %v95 = vsel %vm33, %v53, 0.0
    %96 = vadd.xlane.f32.xlu0 %v95
    %v97 = vpop.xlane.xlu0 %96
    %v98 = vsel %vm33, %v54, 0.0
    %99 = vadd.xlane.f32.xlu0 %v98
    %v100 = vpop.xlane.xlu0 %99
    %v101 = vsel %vm33, %v55, 0.0
    %102 = vadd.xlane.f32.xlu0 %v101
    %v103 = vpop.xlane.xlu0 %102
    %v104 = vmax.f32 %v58, 1e-24
    %v105 = vmax.f32 %v61, 1e-24
    %v106 = vmax.f32 %v64, 1e-24
    %v107 = vmax.f32 %v67, 1e-24
    %v108 = vmax.f32 %v70, 1e-24
    %v109 = vmax.f32 %v73, 1e-24
    %v110 = vmax.f32 %v76, 1e-24
    %v111 = vmax.f32 %v79, 1e-24
    %v112 = vmax.f32 %v82, 1e-24
    %v113 = vmax.f32 %v85, 1e-24
    %v114 = vmax.f32 %v88, 1e-24
    %v115 = vmax.f32 %v91, 1e-24
    %v116 = vmax.f32 %v94, 1e-24
    %v117 = vmax.f32 %v97, 1e-24
    %v118 = vmax.f32 %v100, 1e-24
    %v119 = vmax.f32 %v103, 1e-24
    %v120 = vrsqrt.pop %v104
    %v121 = vrsqrt.pop %v105
    %v122 = vrsqrt.pop %v106
    %v123 = vrsqrt.pop %v107
    %v124 = vrsqrt.pop %v108
    %v125 = vrsqrt.pop %v109
    %v126 = vrsqrt.pop %v110
    %v127 = vrsqrt.pop %v111
    %v128 = vrsqrt.pop %v112
    %v129 = vrsqrt.pop %v113
    %v130 = vrsqrt.pop %v114
    %v131 = vrsqrt.pop %v115
    %v132 = vrsqrt.pop %v116
    %v133 = vrsqrt.pop %v117
    %v134 = vrsqrt.pop %v118
    %v135 = vrsqrt.pop %v119
    %v136 = vmul.f32 %v16, %v120
    %v137 = vmul.f32 %v17, %v121
    %v138 = vmul.f32 %v18, %v122
    %v139 = vmul.f32 %v19, %v123
    %v140 = vmul.f32 %v20, %v124
    %v141 = vmul.f32 %v21, %v125
    %v142 = vmul.f32 %v22, %v126
    %v143 = vmul.f32 %v23, %v127
    %v144 = vmul.f32 %v24, %v128
    %v145 = vmul.f32 %v25, %v129
    %v146 = vmul.f32 %v26, %v130
    %v147 = vmul.f32 %v27, %v131
    %v148 = vmul.f32 %v28, %v132
    %v149 = vmul.f32 %v29, %v133
    %v150 = vmul.f32 %v30, %v134
    %v151 = vmul.f32 %v31, %v135
    %v153 = vsel %vm33, %v39, 0
    %v156 = vsel %vm33, %v136, 0
    %v159 = vsel %vm33, %v137, 0
    %v162 = vsel %vm33, %v138, 0
    %v165 = vsel %vm33, %v139, 0
    %v168 = vsel %vm33, %v140, 0
    %v171 = vsel %vm33, %v141, 0
    %v174 = vsel %vm33, %v142, 0
    %v177 = vsel %vm33, %v143, 0
    %v180 = vsel %vm33, %v144, 0
    %v183 = vsel %vm33, %v145, 0
    %v186 = vsel %vm33, %v146, 0
    %v189 = vsel %vm33, %v147, 0
    %v192 = vsel %vm33, %v148, 0
    %v195 = vsel %vm33, %v149, 0
    %v198 = vsel %vm33, %v150, 0
    %v201 = vsel %vm33, %v151, 0
    %203 = vmatprep.subr.mxu0 0.0
    %204 = vmatpush1.xpose.msra.mxu0 %v156
    %205 = vmatprep.subr.mxu0 0.0
    %206 = vmatpush1.xpose.msra.mxu0 %v159
    %207 = vmatprep.subr.mxu0 0.0
    %208 = vmatpush1.xpose.msra.mxu0 %v162
    %209 = vmatprep.subr.mxu0 0.0
    %210 = vmatpush1.xpose.msra.mxu0 %v165
    %211 = vmatprep.subr.mxu0 0.0
    %212 = vmatpush1.xpose.msra.mxu0 %v168
    %213 = vmatprep.subr.mxu0 0.0
    %214 = vmatpush1.xpose.msra.mxu0 %v171
    %215 = vmatprep.subr.mxu0 0.0
    %216 = vmatpush1.xpose.msra.mxu0 %v174
    %217 = vmatprep.subr.mxu0 0.0
    %218 = vmatpush1.xpose.msra.mxu0 %v177
    %219 = vmatprep.subr.mxu0 0.0
    %220 = vmatpush1.xpose.msra.mxu0 %v180
    %221 = vmatprep.subr.mxu0 0.0
    %222 = vmatpush1.xpose.msra.mxu0 %v183
    %223 = vmatprep.subr.mxu0 0.0
    %224 = vmatpush1.xpose.msra.mxu0 %v186
    %225 = vmatprep.subr.mxu0 0.0
    %226 = vmatpush1.xpose.msra.mxu0 %v189
    %227 = vmatprep.subr.mxu0 0.0
    %228 = vmatpush1.xpose.msra.mxu0 %v192
    %229 = vmatprep.subr.mxu0 0.0
    %230 = vmatpush1.xpose.msra.mxu0 %v195
    %231 = vmatprep.subr.mxu0 0.0
    %232 = vmatpush1.xpose.msra.mxu0 %v198
    %233 = vmatprep.subr.mxu0 0.0
    %234 = vmatpush1.xpose.msra.mxu0 %v201
    %235 = vmatprep.subr.mxu0 0.0
    %236 = vmatpush1.xpose.msra.mxu0 0.0
    %237 = vmatprep.subr.mxu0 0.0
    %238 = vmatpush1.xpose.msra.mxu0 0.0
    %239 = vmatprep.subr.mxu0 0.0
    %240 = vmatpush1.xpose.msra.mxu0 0.0
    %241 = vmatprep.subr.mxu0 0.0
    %242 = vmatpush1.xpose.msra.mxu0 0.0
    %243 = vmatprep.subr.mxu0 0.0
    %244 = vmatpush1.xpose.msra.mxu0 0.0
    %245 = vmatprep.subr.mxu0 0.0
    %246 = vmatpush1.xpose.msra.mxu0 0.0
    %247 = vmatprep.subr.mxu0 0.0
    %248 = vmatpush1.xpose.msra.mxu0 0.0
    %249 = vmatprep.subr.mxu0 0.0
    %250 = vmatpush1.xpose.msra.mxu0 0.0
    %251 = vmatprep.subr.mxu0 0.0
    %252 = vmatpush1.xpose.msra.mxu0 0.0
    %253 = vmatprep.subr.mxu0 0.0
    %254 = vmatpush1.xpose.msra.mxu0 0.0
    %255 = vmatprep.subr.mxu0 0.0
    %256 = vmatpush1.xpose.msra.mxu0 0.0
    %257 = vmatprep.subr.mxu0 0.0
    %258 = vmatpush1.xpose.msra.mxu0 0.0
    %259 = vmatprep.subr.mxu0 0.0
    %260 = vmatpush1.xpose.msra.mxu0 0.0
    %261 = vmatprep.subr.mxu0 0.0
    %262 = vmatpush1.xpose.msra.mxu0 0.0
    %263 = vmatprep.subr.mxu0 0.0
    %264 = vmatpush1.xpose.msra.mxu0 0.0
    %265 = vmatprep.subr.mxu0 0.0
    %266 = vmatpush1.xpose.msra.mxu0 0.0
    %267 = vmatprep.mubr.f32.mxu0 0.0
    %268 = vmatmul.mubr.f32.gmra.mrb[0].mxu0 %v153
    %v269 = vpop.f32.mrb[0].mxu0
    %v270 = vadd.f32 0.0, %v269
    %v271 = vpop.f32.mrb[0].mxu0
    %272 = vdwg.mxu0
    %v273 = vld [vmem:[%s2] sm:$0xff]
    %s274 = smul.u32 0, 128
    %v275 = vlaneseq
    %v276 = vand.u32 %v275, 127
    %v277 = vstv %s274
    %v278 = vadd.s32 %v277, %v276
    %279 = vset.pattern.permute.xlu0 0
    %280 = vperm.xlu0 %279, %v273
    %v281 = vpop.permute.xlu0 %280
    %vm282 = vcmp.eq.s32.totalorder %v278, %v281
    %v283 = vsel %vm282, %v270, 0.0
    %284 = vadd.xlane.f32.xlu0 %v283
    %v285 = vpop.xlane.xlu0 %284
    %v286 = vmax.f32 %v285, -0.9999999
    %v287 = vmin.f32 %v286, 0.9999999
    %v288 = vmul.f32 %v287, 0.87758255
    %v289 = vmul.f32 %v287, %v287
    %v290 = vsub.f32 1.0, %v289
    %v291 = vmax.f32 %v290, 0.0
    %v292 = vrsqrt.pop %v291
    %v293 = vmul.f32 %v291, %v292
    %vm294 = vcmp.eq.f32.partialorder %v291, inf
    %v295 = vsel %vm294, %v291, %v293
    %vm296 = vcmp.eq.f32.partialorder %v291, 0.0
    %v297 = vand.u32 %v291, 2147483648
    %v298 = vsel %vm296, %v297, %v295
    %v299 = vmul.f32 %v298, 0.47942555
    %v300 = vsub.f32 %v288, %v299
    %v301 = vsel %vm282, %v300, %v270
    %v302 = vmul.f32 %v301, 30.0
    %303 = vst [vmem:[#allocation2] sm:$0xff] %v302
    // Predicated region
    $region14: #{tpu_custom_call.1} parent=1 // pred_check
      _
    $region15: #{tpu_custom_call.1} parent=1 // pred_check_branch
      %305 = sbr.rel (0) target = $region17
    $region16: #{tpu_custom_call.1} parent=1 // pred_region
      %s307 = ssub.s32 128, 128
      %308 = vsyncadd [#allocation3], %s307
      %s310 = sshll.u32 [#allocation2], 4
      %s311 = int_to_ptr.vmem [resolvable:$true] %s310
      %313 = dma.vmem_to_hbm [thread:$0]  %s311, 128, %s3, [#allocation3]
    $region17: #{tpu_custom_call.1} parent=1 // pred_fallthru
      _
    // Predicated region
    $region18: #{tpu_custom_call.1} parent=1 // pred_check
      _
    $region19: #{tpu_custom_call.1} parent=1 // pred_check_branch
      %315 = sbr.rel (0) target = $region21
    $region20: #{tpu_custom_call.1} parent=1 // pred_region
      %316 = dma.done [#allocation3], 128
    $region21: #{tpu_custom_call.1} parent=1 // pred_fallthru
      _
    %317 = vsyncpa [#allocation3], 1

</llo_original>
